<compile_context>
chip_gen: v7x
topology: tpu7x:2x2x1
jax: 0.10.0
libtpu: 0.0.40
codegen_flags: <defaults>
</compile_context>

<pallas_src>
import math

import jax
import jax.numpy as jnp
from jax.experimental import pallas as pl
from jax.experimental.pallas import tpu as pltpu


def _round_up(x: int, m: int) -> int:
    return (x + m - 1) // m * m


def rope_kernel(tab_ref, t_ref, o_ref):
    """tab_ref: (2, tS, D) = [cos; sign-folded sin]; t_ref/o_ref: (Bblk, tS, D)."""
    cos = tab_ref[0].astype(jnp.float32)            # (tS, D)
    sin = tab_ref[1].astype(jnp.float32)            # (tS, D) == cat(-sin_h, sin_h)
    d = cos.shape[-1]
    for b in range(t_ref.shape[0]):                 # static unroll over batch block
        t = t_ref[b].astype(jnp.float32)            # (tS, D)
        # roll(t, D/2) = cat(x2, x1); the (-x2, x1) sign lives in sin_ref.
        rot = pltpu.roll(t, shift=d // 2, axis=1)   # XLU lane rotation (positive axis!)
        o_ref[b] = (t * cos + rot * sin).astype(o_ref.dtype)


def rotary_embedding(t: jax.Array, base: float = 10000.0,
                     seq_tile: int | None = None,
                     tile_cap_bytes: int = 4 * 1024 * 1024) -> jax.Array:
    """Apply rotary position embedding. t: [B, S, D] (seq_dim=-2)."""
    B, S, D = t.shape
    assert D % 2 == 0, "d_model must be even for RoPE"

    itemsize = jnp.dtype(t.dtype).itemsize
    sub_mult = {4: 8, 2: 16, 1: 32}.get(itemsize, 8)   # sublane packing per dtype

    # Fold small batches into the block (fewer grid steps, bigger DMAs).
    bblk = 1
    for cand in range(min(B, 8), 0, -1):
        if B % cand == 0:
            bblk = cand
            break

    # Sequence tile: largest sublane-aligned row count with a ~tile_cap_bytes
    # (Bblk, tS, D) activation tile; ragged S is handled by padding, never by
    # falling back to a whole-sequence tile.
    if seq_tile is None:
        rows = max(sub_mult, tile_cap_bytes // max(1, bblk * D * itemsize))
        rows -= rows % sub_mult
        tS = min(rows, _round_up(S, sub_mult))
    else:
        tS = seq_tile
        assert tS % sub_mult == 0, "seq_tile must respect sublane packing"
    S_pad = _round_up(S, tS)
    n_s, n_b = S_pad // tS, B // bblk

    # --- cos / sin caches, computed once in the wrapper (== module buffers),
    # sign folded into sin so rotate_half(t)*sin == roll(t, D/2)*sin_signed,
    # stacked into a single table and cast to the activation dtype.
    div_term = jnp.exp(
        jnp.arange(0, D, 2, dtype=jnp.float32) * (-math.log(base) / D)
    )                                                    # (D/2,)
    pos = jnp.arange(S_pad, dtype=jnp.float32)           # (S_pad,)
    freqs = pos[:, None] * div_term[None, :]              # (S_pad, D/2)
    cos_h, sin_h = jnp.cos(freqs), jnp.sin(freqs)
    cos = jnp.concatenate([cos_h, cos_h], axis=-1)         # (S_pad, D)
    sin_signed = jnp.concatenate([-sin_h, sin_h], axis=-1)  # sign folded in
    tab = jnp.stack([cos, sin_signed], axis=0).astype(t.dtype)   # (2, S_pad, D)

    t_in = t if S_pad == S else jnp.pad(t, ((0, 0), (0, S_pad - S), (0, 0)))

    # Explicit VMEM budget: double-buffered {table, t, out} tiles + headroom.
    tab_bytes = 2 * tS * D * itemsize
    blk_bytes = bblk * tS * D * itemsize
    needed = 2 * (tab_bytes + 2 * blk_bytes) + (4 << 20)
    vmem_limit = int(min(48 << 20, max(needed, 16 << 20)))

    out = pl.pallas_call(
        rope_kernel,
        out_shape=jax.ShapeDtypeStruct((B, S_pad, D), t.dtype),
        grid_spec=pltpu.PrefetchScalarGridSpec(
            num_scalar_prefetch=0,
            grid=(n_s, n_b),               # batch innermost: table tile stays
            in_specs=[                     # resident across all batch blocks.
                pl.BlockSpec((2, tS, D), lambda s, b: (0, s, 0)),       # cos|sin
                pl.BlockSpec((bblk, tS, D), lambda s, b: (b, s, 0)),    # t
            ],
            out_specs=pl.BlockSpec((bblk, tS, D), lambda s, b: (b, s, 0)),
        ),
        compiler_params=pltpu.CompilerParams(
            dimension_semantics=("parallel", "parallel"),   # disjoint outputs
            vmem_limit_bytes=vmem_limit,
        ),
    )(tab, t_in)

    return out if S_pad == S else out[:, :S, :]


def rotary_embedding_ref(t: jax.Array, base: float = 10000.0) -> jax.Array:
    """Pure-JAX reference matching the PyTorch module exactly."""
    B, S, D = t.shape
    div_term = jnp.exp(
        jnp.arange(0, D, 2, dtype=jnp.float32) * (-math.log(base) / D)
    )
    pos = jnp.arange(S, dtype=jnp.float32)
    freqs = jnp.einsum("i,j->ij", pos, div_term)         # (S, D/2)
    emb = jnp.concatenate([freqs, freqs], axis=-1)       # (S, D)
    cos = jnp.cos(emb)[None]                             # (1, S, D)
    sin = jnp.sin(emb)[None]
    x1, x2 = t[..., : D // 2], t[..., D // 2:]
    rot = jnp.concatenate([-x2, x1], axis=-1)
    return t * cos + rot * sin


if __name__ == "__main__":
    root = jax.random.PRNGKey(0)
    k1, k2, k3 = jax.random.split(root, 3)

    # 1) Small lane-dense f32 case, explicit sequence tiling (grid (2, 1)).
    t1 = jax.random.normal(k1, (2, 16, 128), dtype=jnp.float32)
    o1 = jax.block_until_ready(rotary_embedding(t1, seq_tile=8))
    r1 = rotary_embedding_ref(t1)
    assert o1.shape == t1.shape
    assert jnp.allclose(o1, r1, atol=1e-5, rtol=1e-5), "f32 mismatch vs reference"

    # 2) Ragged sequence (pad path, S=20 with tile 16) + odd batch folded (B=3).
    t2 = jax.random.normal(k2, (3, 20, 128), dtype=jnp.float32)
    o2 = jax.block_until_ready(rotary_embedding(t2, seq_tile=16))
    r2 = rotary_embedding_ref(t2)
    assert o2.shape == t2.shape
    assert jnp.allclose(o2, r2, atol=1e-5, rtol=1e-5), "ragged-S mismatch vs reference"

    # 3) bf16 activations with dtype-matched tables (f32 compute in-kernel).
    t3 = jax.random.normal(k3, (2, 32, 128), dtype=jnp.bfloat16)
    o3 = jax.block_until_ready(rotary_embedding(t3))
    r3 = rotary_embedding_ref(t3.astype(jnp.float32))
    assert o3.shape == t3.shape
    assert jnp.allclose(o3.astype(jnp.float32), r3, atol=5e-2, rtol=5e-2), \
        "bf16 mismatch vs reference"

    print("KERNEL_OK")
</pallas_src>

<mosaic_0001>
module attributes {stable_mosaic.version = 11 : i64} {
  func.func @rope_kernel(%arg0: i32, %arg1: i32, %arg2: memref<2x8x128xf32, #tpu.memory_space<vmem>>, %arg3: memref<2x8x128xf32, #tpu.memory_space<vmem>>, %arg4: memref<2x8x128xf32, #tpu.memory_space<vmem>>) attributes {dimension_semantics = [#tpu.dimension_semantics<parallel>, #tpu.dimension_semantics<parallel>], iteration_bounds = array<i64: 2, 1>, scalar_prefetch = 0 : i64, scratch_operands = 0 : i64, tpu.core_type = #tpu.core_type<tc>, window_params = [{transform_indices = @transform_0, window_bounds = array<i64: 2, 8, 128>}, {transform_indices = @transform_1, window_bounds = array<i64: 2, 8, 128>}, {transform_indices = @transform_2, window_bounds = array<i64: 2, 8, 128>}]} {
    %c0 = arith.constant 0 : index
    %c0_0 = arith.constant 0 : index
    %c0_1 = arith.constant 0 : index
    %0 = vector.load %arg2[%c0, %c0_0, %c0_1] : memref<2x8x128xf32, #tpu.memory_space<vmem>>, vector<1x8x128xf32>
    %1 = vector.shape_cast %0 : vector<1x8x128xf32> to vector<8x128xf32>
    %c1 = arith.constant 1 : index
    %c0_2 = arith.constant 0 : index
    %c0_3 = arith.constant 0 : index
    %2 = vector.load %arg2[%c1, %c0_2, %c0_3] : memref<2x8x128xf32, #tpu.memory_space<vmem>>, vector<1x8x128xf32>
    %3 = vector.shape_cast %2 : vector<1x8x128xf32> to vector<8x128xf32>
    %c0_4 = arith.constant 0 : index
    %c0_5 = arith.constant 0 : index
    %c0_6 = arith.constant 0 : index
    %4 = vector.load %arg3[%c0_4, %c0_5, %c0_6] : memref<2x8x128xf32, #tpu.memory_space<vmem>>, vector<1x8x128xf32>
    %5 = vector.shape_cast %4 : vector<1x8x128xf32> to vector<8x128xf32>
    %c64_i32 = arith.constant 64 : i32
    %6 = tpu.dynamic_rotate %5 by %c64_i32 dim 1 : vector<8x128xf32>, i32 -> vector<8x128xf32>
    %7 = arith.mulf %5, %1 : vector<8x128xf32>
    %8 = arith.mulf %6, %3 : vector<8x128xf32>
    %9 = arith.addf %7, %8 : vector<8x128xf32>
    %c0_7 = arith.constant 0 : index
    %c0_8 = arith.constant 0 : index
    %c0_9 = arith.constant 0 : index
    %10 = vector.load %arg4[%c0_7, %c0_8, %c0_9] : memref<2x8x128xf32, #tpu.memory_space<vmem>>, vector<1x8x128xf32>
    %11 = vector.shape_cast %10 : vector<1x8x128xf32> to vector<8x128xf32>
    %12 = vector.shape_cast %9 : vector<8x128xf32> to vector<1x8x128xf32>
    tpu.vector_store %arg4[%c0_7, %c0_8, %c0_9], %12 {strides = array<i32>} : memref<2x8x128xf32, #tpu.memory_space<vmem>>, vector<1x8x128xf32>,
    %c1_10 = arith.constant 1 : index
    %c0_11 = arith.constant 0 : index
    %c0_12 = arith.constant 0 : index
    %13 = vector.load %arg3[%c1_10, %c0_11, %c0_12] : memref<2x8x128xf32, #tpu.memory_space<vmem>>, vector<1x8x128xf32>
    %14 = vector.shape_cast %13 : vector<1x8x128xf32> to vector<8x128xf32>
    %c64_i32_13 = arith.constant 64 : i32
    %15 = tpu.dynamic_rotate %14 by %c64_i32_13 dim 1 : vector<8x128xf32>, i32 -> vector<8x128xf32>
    %16 = arith.mulf %14, %1 : vector<8x128xf32>
    %17 = arith.mulf %15, %3 : vector<8x128xf32>
    %18 = arith.addf %16, %17 : vector<8x128xf32>
    %c1_14 = arith.constant 1 : index
    %c0_15 = arith.constant 0 : index
    %c0_16 = arith.constant 0 : index
    %19 = vector.load %arg4[%c1_14, %c0_15, %c0_16] : memref<2x8x128xf32, #tpu.memory_space<vmem>>, vector<1x8x128xf32>
    %20 = vector.shape_cast %19 : vector<1x8x128xf32> to vector<8x128xf32>
    %21 = vector.shape_cast %18 : vector<8x128xf32> to vector<1x8x128xf32>
    tpu.vector_store %arg4[%c1_14, %c0_15, %c0_16], %21 {strides = array<i32>} : memref<2x8x128xf32, #tpu.memory_space<vmem>>, vector<1x8x128xf32>,
    return
  }
  func.func @transform_0(%arg0: i32, %arg1: i32) -> (i32, i32, i32) {
    %c0_i32 = arith.constant 0 : i32
    %c0_i32_0 = arith.constant 0 : i32
    %c0_i32_1 = arith.constant 0 : i32
    return %c0_i32, %arg0, %c0_i32_0 : i32, i32, i32
  }
  func.func @transform_1(%arg0: i32, %arg1: i32) -> (i32, i32, i32) {
    %c0_i32 = arith.constant 0 : i32
    %c0_i32_0 = arith.constant 0 : i32
    return %arg1, %arg0, %c0_i32 : i32, i32, i32
  }
  func.func @transform_2(%arg0: i32, %arg1: i32) -> (i32, i32, i32) {
    %c0_i32 = arith.constant 0 : i32
    %c0_i32_0 = arith.constant 0 : i32
    return %arg1, %arg0, %c0_i32 : i32, i32, i32
  }
}

</mosaic_0001>

<llo_original>
// kernel: tpu_custom_call.1
$region0: #{tpu_custom_call.1}
  #allocation0 [shape = 'u32[]', space=smem, size = 0x4, offset = 0x4, fixed_abs, tag = 'smem constant byte address 0x4 - core index']
  #allocation1 [shape = 'u32[144,128]{1,0:T(1,128)}', space=vmem, size = 0x12000, scoped, tag = 'internal scratch']
  %s0 = inlined_call_operand.hbm [shape: f32[2,16,128], index: 0, kind: input, shape index: {}]
  %s1 = inlined_call_operand.hbm [shape: f32[2,16,128], index: 1, kind: input, shape index: {}]
  %s2 = inlined_call_operand.hbm [shape: f32[2,16,128], index: 2, kind: output, shape index: {}]
  %s3 = sld [smem:[#allocation0]]
  $region49: #{tpu_custom_call.1} parent=0
    _
  %s5 = ssub.s32 1, %s3
  %s6 = scalar_select 0, %s5, %s3
  $region1: #{tpu_custom_call.1} parent=0
    #allocation2 [shape = 'u8[16384]{0}', space=vmem, size = 0x4000, scoped, tag = 'input window, operand 0']
    #allocation3 [shape = 's32[2]{0}', space=sflag, size = 0x8, scoped, tag = 'scoped memory for tpu_custom_call.1']
    #allocation4 [shape = 's32[2]{0}', space=sflag, size = 0x8, scoped, tag = 'scoped memory for tpu_custom_call.1']
    #allocation5 [shape = 'u8[16384]{0}', space=vmem, size = 0x4000, scoped, tag = 'input window, operand 1']
    #allocation6 [shape = 's32[2]{0}', space=sflag, size = 0x8, scoped, tag = 'scoped memory for tpu_custom_call.1']
    #allocation7 [shape = 'u8[16384]{0}', space=vmem, size = 0x4000, scoped, tag = 'output window, operand 0']
    %7 = vsyncpa [#allocation3], 0
    %s8 = scalar_lea.sflag [#allocation3], 1
    %9 = vsyncpa %s8, 0
    %10 = vsyncpa [#allocation6], 0
    %s11 = scalar_lea.sflag [#allocation6], 1
    %12 = vsyncpa %s11, 0
    %13 = vsyncpa [#allocation4], 0
    %s14 = scalar_lea.sflag [#allocation4], 1
    %15 = vsyncpa %s14, 0
    loop: start=0, step=1, limit=4
    $region2: #{tpu_custom_call.1} parent=1 // loop_pre_header
      _
    $region3: #{tpu_custom_call.1} parent=1 // loop_header
      %s17 = sphi 0, %s21
      %p18 = scmp.ge.s32.totalorder %s17, 4
      %s24 = sphi 0, %s36
      %s25 = sphi 0, %s32
      %s26 = sphi 0, %s24
      %s27 = sphi 0, %s25
      %s28 = sphi 0, %s26
      %s29 = sphi 0, %s27
      %s39 = sphi 0, %s41
      %s42 = sphi 0, %s39
      %s43 = sphi 0, %s42
      %s59 = sphi 0, %s43
      %s67 = sphi 0, %s69
      %s70 = sphi 0, %s67
      %s71 = sphi 0, %s70
      %s87 = sphi 0, %s71
      %s95 = sphi 0, %s97
      %s98 = sphi 0, %s95
      %s99 = sphi 0, %s98
      %s115 = sphi 0, %s99
    $region4: #{tpu_custom_call.1} parent=1 // loop_header_branch
      %20 = sbr.rel (%p18) target = $region8
    $region5: #{tpu_custom_call.1} parent=1 // loop_body
      %s22 = ssub.s32 %s17, 1
      %s23 = ssub.s32 %s17, 2
      %s30 = sadd.s32 1, %s25
      %p31 = scmp.ge.s32.totalorder %s30, 1
      %s32 = scalar_select %p31, 0, %s30
      %s33 = sadd.s32 1, %s24
      %s34 = scalar_select %p31, %s33, %s24
      %p35 = scmp.ge.s32.totalorder %s34, 2
      %s36 = scalar_select %p35, 0, %s34
      %s37 = ssub.s32 %s24, %s36
      %p38 = scmp.eq.s32.totalorder %s37, 0
      %s40 = sadd.s32 %s39, 1
      %s41 = scalar_select %p38, %s39, %s40
      %p44 = pneg %p38
      %p45 = scmp.eq.s32.totalorder %s17, 1
      %p46 = por %p44, %p45
      %p47 = scmp.ne.s32.totalorder %s39, %s42
      %p48 = scmp.eq.s32.totalorder %s17, 0
      %p49 = por %p47, %p48
      %p50 = scmp.ne.s32.totalorder %s39, %s42
      %p51 = scmp.eq.s32.totalorder %s22, 1
      %p52 = por %p50, %p51
      %p53 = scmp.ne.s32.totalorder %s42, %s43
      %p54 = scmp.eq.s32.totalorder %s22, 0
      %p55 = por %p53, %p54
      %p56 = scmp.ne.s32.totalorder %s42, %s43
      %p57 = scmp.eq.s32.totalorder %s23, 1
      %p58 = por %p56, %p57
      %p60 = scmp.ne.s32.totalorder %s43, %s59
      %p61 = scmp.eq.s32.totalorder %s23, 0
      %p62 = por %p60, %p61
      %s63 = ssub.s32 %s25, %s32
      %s64 = ssub.s32 %s24, %s36
      %s65 = sor.u32 %s63, %s64
      %p66 = scmp.eq.s32.totalorder %s65, 0
      %s68 = sadd.s32 %s67, 1
      %s69 = scalar_select %p66, %s67, %s68
      %p72 = pneg %p66
      %p73 = scmp.eq.s32.totalorder %s17, 1
      %p74 = por %p72, %p73
      %p75 = scmp.ne.s32.totalorder %s67, %s70
      %p76 = scmp.eq.s32.totalorder %s17, 0
      %p77 = por %p75, %p76
      %p78 = scmp.ne.s32.totalorder %s67, %s70
      %p79 = scmp.eq.s32.totalorder %s22, 1
      %p80 = por %p78, %p79
      %p81 = scmp.ne.s32.totalorder %s70, %s71
      %p82 = scmp.eq.s32.totalorder %s22, 0
      %p83 = por %p81, %p82
      %p84 = scmp.ne.s32.totalorder %s70, %s71
      %p85 = scmp.eq.s32.totalorder %s23, 1
      %p86 = por %p84, %p85
      %p88 = scmp.ne.s32.totalorder %s71, %s87
      %p89 = scmp.eq.s32.totalorder %s23, 0
      %p90 = por %p88, %p89
      %s91 = ssub.s32 %s25, %s32
      %s92 = ssub.s32 %s24, %s36
      %s93 = sor.u32 %s91, %s92
      %p94 = scmp.eq.s32.totalorder %s93, 0
      %s96 = sadd.s32 %s95, 1
      %s97 = scalar_select %p94, %s95, %s96
      %p100 = pneg %p94
      %p101 = scmp.eq.s32.totalorder %s17, 1
      %p102 = por %p100, %p101
      %p103 = scmp.ne.s32.totalorder %s95, %s98
      %p104 = scmp.eq.s32.totalorder %s17, 0
      %p105 = por %p103, %p104
      %p106 = scmp.ne.s32.totalorder %s95, %s98
      %p107 = scmp.eq.s32.totalorder %s22, 1
      %p108 = por %p106, %p107
      %p109 = scmp.ne.s32.totalorder %s98, %s99
      %p110 = scmp.eq.s32.totalorder %s22, 0
      %p111 = por %p109, %p110
      %p112 = scmp.ne.s32.totalorder %s98, %s99
      %p113 = scmp.eq.s32.totalorder %s23, 1
      %p114 = por %p112, %p113
      %p116 = scmp.ne.s32.totalorder %s99, %s115
      %p117 = scmp.eq.s32.totalorder %s23, 0
      %p118 = por %p116, %p117
      %p119 = scmp.le.s32.totalorder 1, %s17
      %p120 = scmp.lt.s32.totalorder %s17, 3
      %p121 = pnand %p119, %p120
      %p122 = pneg %p121
      // Predicated region
      $region9: #{tpu_custom_call.1} parent=5 // pred_check
        _
      $region10: #{tpu_custom_call.1} parent=5 // pred_check_branch
        %124 = sbr.rel (%p121) target = $region12
      $region11: #{tpu_custom_call.1} parent=5 // pred_region
        %s125 = ssub.s32 %s17, 1
      $region12: #{tpu_custom_call.1} parent=5 // pred_fallthru
        _
      %p126 = scmp.lt.s32.totalorder %s17, 2
      // Predicated region
      $region13: #{tpu_custom_call.1} parent=5 // pred_check
        %p127 = pneg %p126
      $region14: #{tpu_custom_call.1} parent=5 // pred_check_branch
        %129 = sbr.rel (%p127) target = $region16
      $region15: #{tpu_custom_call.1} parent=5 // pred_region
        // Predicated region
        $region17: #{tpu_custom_call.1} parent=15 // pred_check
          %p130 = pneg %p49
        $region18: #{tpu_custom_call.1} parent=15 // pred_check_branch
          %132 = sbr.rel (%p130) target = $region20
        $region19: #{tpu_custom_call.1} parent=15 // pred_region
          %s133 = sand.u32 %s39, 1
          %s134 = scalar_lea.sflag [#allocation3], %s133
          %s135 = sand.u32 %s39, 1
          %s136 = smul.addr %s135, 16
          %s137 = scalar_lea.vmem [#allocation2], %s136
          %s139 = ssub.s32 256, 256
          %140 = vsyncadd %s134, %s139
          %s141 = smul.addr %s24, 128
          %s142 = scalar_lea.hbm %s0, %s141
          %s143 = sshll.u32 %s137, 4
          %s144 = int_to_ptr.vmem [resolvable:$true] %s143
          %149 = dma.hbm_to_vmem [thread:$0]  %s142, 256, %s144, %s134, 256, 128, 8
        $region20: #{tpu_custom_call.1} parent=15 // pred_fallthru
          _
        // Predicated region
        $region21: #{tpu_custom_call.1} parent=15 // pred_check
          %p150 = pneg %p77
        $region22: #{tpu_custom_call.1} parent=15 // pred_check_branch
          %152 = sbr.rel (%p150) target = $region24
        $region23: #{tpu_custom_call.1} parent=15 // pred_region
          %s153 = sand.u32 %s67, 1
          %s154 = scalar_lea.sflag [#allocation6], %s153
          %s155 = sand.u32 %s67, 1
          %s156 = smul.addr %s155, 16
          %s157 = scalar_lea.vmem [#allocation5], %s156
          %s158 = smul.u32 2, %s25
          %s160 = ssub.s32 256, 256
          %161 = vsyncadd %s154, %s160
          %s162 = smul.addr %s158, 2
          %s163 = sadd.s32 %s24, %s162
          %s164 = smul.addr %s163, 128
          %s165 = scalar_lea.hbm %s1, %s164
          %s166 = sshll.u32 %s157, 4
          %s167 = int_to_ptr.vmem [resolvable:$true] %s166
          %172 = dma.hbm_to_vmem [thread:$0]  %s165, 256, %s167, %s154, 256, 128, 8
        $region24: #{tpu_custom_call.1} parent=15 // pred_fallthru
          _
      $region16: #{tpu_custom_call.1} parent=5 // pred_fallthru
        _
      %p173 = scmp.le.s32.totalorder 1, %s17
      %p174 = scmp.lt.s32.totalorder %s17, 3
      %p175 = pnand %p173, %p174
      %p176 = pneg %p175
      // Predicated region
      $region25: #{tpu_custom_call.1} parent=5 // pred_check
        _
      $region26: #{tpu_custom_call.1} parent=5 // pred_check_branch
        %178 = sbr.rel (%p175) target = $region28
      $region27: #{tpu_custom_call.1} parent=5 // pred_region
        %s179 = ssub.s32 %s17, 1
        %s180 = sand.u32 %s42, 1
        %s181 = scalar_lea.sflag [#allocation3], %s180
        %s182 = sand.u32 %s42, 1
        %s183 = smul.addr %s182, 16
        %s184 = scalar_lea.vmem [#allocation2], %s183
        // Predicated region
        $region29: #{tpu_custom_call.1} parent=27 // pred_check
          %p185 = pneg %p55
        $region30: #{tpu_custom_call.1} parent=27 // pred_check_branch
          %187 = sbr.rel (%p185) target = $region32
        $region31: #{tpu_custom_call.1} parent=27 // pred_region
          %188 = dma.done %s181, 256
        $region32: #{tpu_custom_call.1} parent=27 // pred_fallthru
          _
        %s189 = sand.u32 %s70, 1
        %s190 = scalar_lea.sflag [#allocation6], %s189
        %s191 = sand.u32 %s70, 1
        %s192 = smul.addr %s191, 16
        %s193 = scalar_lea.vmem [#allocation5], %s192
        // Predicated region
        $region33: #{tpu_custom_call.1} parent=27 // pred_check
          %p194 = pneg %p83
        $region34: #{tpu_custom_call.1} parent=27 // pred_check_branch
          %196 = sbr.rel (%p194) target = $region36
        $region35: #{tpu_custom_call.1} parent=27 // pred_region
          %197 = dma.done %s190, 256
        $region36: #{tpu_custom_call.1} parent=27 // pred_fallthru
          _
        %s198 = sand.u32 %s42, 1
        %s199 = scalar_lea.sflag [#allocation3], %s198
        %s200 = sand.u32 %s42, 1
        %s201 = smul.addr %s200, 16
        %s202 = scalar_lea.vmem [#allocation2], %s201
        %p203 = pneg %p55
        %p204 = pneg %p52
        %s205 = sand.u32 %s70, 1
        %s206 = scalar_lea.sflag [#allocation6], %s205
        %s207 = sand.u32 %s70, 1
        %s208 = smul.addr %s207, 16
        %s209 = scalar_lea.vmem [#allocation5], %s208
        %p210 = pneg %p83
        %p211 = pneg %p80
        %p212 = pneg %p111
        %p213 = pneg %p108
        %s214 = sand.u32 %s98, 1
        %s215 = scalar_lea.sflag [#allocation4], %s214
        %s216 = sand.u32 %s98, 1
        %s217 = smul.addr %s216, 16
        %s218 = scalar_lea.vmem [#allocation7], %s217
        %s219 = smul.u32 2, %s27
        %s220 = smul.u32 2, %s27
        %v221 = vld [vmem:[%s184] sm:$0xff]
        %s222 = scalar_lea.vmem %s184, 8 [#allocation2]
        %v223 = vld [vmem:[%s222] sm:$0xff]
        %v224 = vld [vmem:[%s193] sm:$0xff]
        %225 = vrot.lane.b32.xlu0 %v224, 64
        %v226 = vpop.permute.xlu0 %225
        %v227 = vmul.f32 %v224, %v221
        %v228 = vmul.f32 %v226, %v223
        %v229 = vadd.f32 %v227, %v228
        %230 = vst [vmem:[%s218] sm:$0xff] %v229
        %s231 = scalar_lea.vmem %s193, 8 [#allocation5]
        %v232 = vld [vmem:[%s231] sm:$0xff]
        %233 = vrot.lane.b32.xlu0 %v232, 64
        %v234 = vpop.permute.xlu0 %233
        %v235 = vmul.f32 %v232, %v221
        %v236 = vmul.f32 %v234, %v223
        %v237 = vadd.f32 %v235, %v236
        %s238 = scalar_lea.vmem %s218, 8 [#allocation7]
        %239 = vst [vmem:[%s238] sm:$0xff] %v237
        %s240 = sand.u32 %s98, 1
        %s241 = scalar_lea.sflag [#allocation4], %s240
        %s242 = sand.u32 %s98, 1
        %s243 = smul.addr %s242, 16
        %s244 = scalar_lea.vmem [#allocation7], %s243
        // Predicated region
        $region37: #{tpu_custom_call.1} parent=27 // pred_check
          %p245 = pneg %p108
        $region38: #{tpu_custom_call.1} parent=27 // pred_check_branch
          %247 = sbr.rel (%p245) target = $region40
        $region39: #{tpu_custom_call.1} parent=27 // pred_region
          %s248 = smul.u32 2, %s27
          %s250 = ssub.s32 256, 256
          %251 = vsyncadd %s241, %s250
          %s252 = smul.addr %s248, 2
          %s253 = sadd.s32 %s26, %s252
          %s254 = smul.addr %s253, 128
          %s255 = scalar_lea.hbm %s2, %s254
          %s256 = sshll.u32 %s244, 4
          %s257 = int_to_ptr.vmem [resolvable:$true] %s256
          %262 = dma.vmem_to_hbm [thread:$0]  %s257, 256, %s255, %s241, 128, 256, 8
        $region40: #{tpu_custom_call.1} parent=27 // pred_fallthru
          _
      $region28: #{tpu_custom_call.1} parent=5 // pred_fallthru
        _
      %p263 = scmp.le.s32.totalorder 2, %s17
      // Predicated region
      $region41: #{tpu_custom_call.1} parent=5 // pred_check
        %p264 = pneg %p263
      $region42: #{tpu_custom_call.1} parent=5 // pred_check_branch
        %266 = sbr.rel (%p264) target = $region44
      $region43: #{tpu_custom_call.1} parent=5 // pred_region
        %s267 = ssub.s32 %s17, 2
        // Predicated region
        $region45: #{tpu_custom_call.1} parent=43 // pred_check
          %p268 = pneg %p114
        $region46: #{tpu_custom_call.1} parent=43 // pred_check_branch
          %270 = sbr.rel (%p268) target = $region48
        $region47: #{tpu_custom_call.1} parent=43 // pred_region
          %s271 = sand.u32 %s99, 1
          %s272 = scalar_lea.sflag [#allocation4], %s271
          %s273 = sand.u32 %s99, 1
          %s274 = smul.addr %s273, 16
          %s275 = scalar_lea.vmem [#allocation7], %s274
          %276 = dma.done %s272, 256
        $region48: #{tpu_custom_call.1} parent=43 // pred_fallthru
          _
      $region44: #{tpu_custom_call.1} parent=5 // pred_fallthru
        _
    $region6: #{tpu_custom_call.1} parent=1 // loop_footer
      %s21 = sadd.s32 1, %s17
    $region7: #{tpu_custom_call.1} parent=1 // loop_footer_branch
      %16 = sbr.rel target = $region3
    $region8: #{tpu_custom_call.1} parent=1 // loop_exit
      _
    %277 = vsyncpa [#allocation3], 1
    %s278 = scalar_lea.sflag [#allocation3], 1
    %279 = vsyncpa %s278, 1
    %280 = vsyncpa [#allocation6], 1
    %s281 = scalar_lea.sflag [#allocation6], 1
    %282 = vsyncpa %s281, 1
    %283 = vsyncpa [#allocation4], 1
    %s284 = scalar_lea.sflag [#allocation4], 1
    %285 = vsyncpa %s284, 1

</llo_original>
